<compile_context>
chip_gen: v7x
topology: tpu7x:2x2x1
jax: 0.10.0
libtpu: 0.0.40
codegen_flags: <defaults>
</compile_context>

<pallas_src>
import jax
import jax.numpy as jnp
from jax import lax
from jax.experimental import pallas as pl
from jax.experimental.pallas import tpu as pltpu


def _round_up(x, m):
    return (x + m - 1) // m * m


# Rows/step below this don't amortize the ~0.35 us fixed per-grid-step cost.
_TILE_FLOOR = 4096
# Aim for >= this many grid steps at large N so ("parallel",) uses both v7x TCs.
_TARGET_GRID_STEPS = 4
# Hard cap keeps double-buffered VMEM (~1.06 KiB/row) under v5e's 16 MiB
# scoped default; raise together with CompilerParams(vmem_limit_bytes=...) if
# you want bigger tiles on v6e/v7x.
_TILE_CAP = 8192


def _choose_tile(n, tile_n):
    tile = min(tile_n, _TILE_CAP,
               max(_TILE_FLOOR, _round_up(pl.cdiv(n, _TARGET_GRID_STEPS), 128)))
    # Multi-block path requires the (p, tile) output block's lane dim to be a
    # multiple of 128.
    return _round_up(max(tile, 128), 128)


def _value_tail_kernel(x_ref, w_ref, b_ref, o_ref):
    """One batch tile of Linear(F->P) + softmax(players), stored transposed.

    x_ref: (TILE_N, F)  activation tile for this grid step
    w_ref: (P, F)       Linear weight (PyTorch layout), VMEM-resident
    b_ref: (P, 1)       Linear bias, VMEM-resident
    o_ref: (P, TILE_N)  softmax probabilities, lane-dense in the batch dim
    """
    x = x_ref[...]

    # logits^T = W @ x^T -> (P, TILE_N): contract the feature axis of both
    # operands (A @ B^T MXU pattern) so the tiny player axis lands on sublanes
    # and the batch axis stays lane-dense for compute and stores.
    logits_t = lax.dot_general(
        w_ref[...], x, (((1,), (1,)), ((), ())),
        preferred_element_type=jnp.float32,
    ) + b_ref[...]

    # Numerically-stable softmax over the player axis (axis 0 / sublanes, XLU).
    m = jnp.max(logits_t, axis=0, keepdims=True)
    e = jnp.exp(logits_t - m)
    denom = jnp.sum(e, axis=0, keepdims=True)
    inv = pl.reciprocal(denom, approx=True)  # EUP slot; ~1e-4 rel error
    o_ref[...] = (e * inv).astype(o_ref.dtype)


def simple_value_tail(x, w, b, *, tile_n=8192, min_rows_for_pallas=4096,
                      transposed_output=False):
    """Linear(F -> P) followed by Softmax(dim=-1).

    x: (N, F) f32, w: (P, F) f32 (PyTorch nn.Linear layout), b: (P,) f32.
    Returns (N, P) f32 probabilities (or (P, N) if transposed_output=True).
    """
    n, f = x.shape
    p = w.shape[0]

    if n < min_rows_for_pallas:
        # Small-N fast path: the Pallas call would be pure launch + fixed DMA
        # overhead here; XLA fusion wins by a wide margin.
        probs = jax.nn.softmax(x @ w.T + b[None, :], axis=-1)
        return probs.T if transposed_output else probs

    tile = _choose_tile(n, tile_n)
    b2 = b.reshape(p, 1).astype(jnp.float32)

    if n <= tile:
        # Single block == full arrays: no (8,128) divisibility constraint and
        # no ragged edge.
        tile = n
        grid = (1,)
    else:
        # Ragged last block is clamped by Pallas: OOB x rows read unspecified
        # data (confined to their own softmax columns), OOB output columns are
        # dropped on writeback.  No jnp.pad copy of x.
        grid = (pl.cdiv(n, tile),)

    out_t = pl.pallas_call(
        _value_tail_kernel,
        out_shape=jax.ShapeDtypeStruct((p, n), jnp.float32),
        grid=grid,
        in_specs=[
            pl.BlockSpec((tile, f), lambda i: (i, 0)),   # batch tile of x
            pl.BlockSpec((p, f), lambda i: (0, 0)),      # weight: VMEM-resident
            pl.BlockSpec((p, 1), lambda i: (0, 0)),      # bias: VMEM-resident
        ],
        out_specs=pl.BlockSpec((p, tile), lambda i: (0, i)),
        compiler_params=pltpu.CompilerParams(
            dimension_semantics=("parallel",),  # batch tiles shard across TCs (v7x)
        ),
    )(x.astype(jnp.float32), w.astype(jnp.float32), b2)

    if transposed_output:
        # (P, N): no extra HBM pass; let a fused consumer index this layout.
        return out_t
    # Module contract (N, P): one small XLA transpose over 16N bytes.
    return out_t.T


def _reference(x, w, b):
    return jax.nn.softmax(x @ w.T + b[None, :], axis=-1)


if __name__ == "__main__":
    key = jax.random.PRNGKey(0)
    kx, kw, kb, kx2 = jax.random.split(key, 4)

    # Module config: input_dimensions=F, players=P; forward input (N, F).
    N, F, P = 8, 32, 4
    bound = 1.0 / (F ** 0.5)
    x = jax.random.normal(kx, (N, F), dtype=jnp.float32)
    # Deterministic init mimicking nn.Linear's uniform(-1/sqrt(F), 1/sqrt(F)).
    w = jax.random.uniform(kw, (P, F), dtype=jnp.float32, minval=-bound, maxval=bound)
    b = jax.random.uniform(kb, (P,), dtype=jnp.float32, minval=-bound, maxval=bound)

    ref = _reference(x, w, b)

    # 1) Default path at tiny N: small-N XLA fast path (exact).
    out_fast = jax.block_until_ready(simple_value_tail(x, w, b))
    assert out_fast.shape == (N, P)
    assert jnp.allclose(out_fast, ref, atol=1e-5, rtol=1e-5)

    # 2) Forced Pallas path, single full-array block.
    out_k = jax.block_until_ready(simple_value_tail(x, w, b, min_rows_for_pallas=0))
    assert out_k.shape == (N, P)
    assert jnp.allclose(out_k, ref, atol=2e-3, rtol=2e-3)

    # 3) Forced Pallas path, multi-block grid with a ragged last block
    #    (N2=300, tile=128 -> grid=3, last block covers only 44 columns).
    N2 = 300
    x2 = jax.random.normal(kx2, (N2, F), dtype=jnp.float32)
    ref2 = _reference(x2, w, b)
    out_k2 = jax.block_until_ready(
        simple_value_tail(x2, w, b, tile_n=128, min_rows_for_pallas=0))
    assert out_k2.shape == (N2, P)
    assert jnp.allclose(out_k2, ref2, atol=2e-3, rtol=2e-3)

    # 4) Transposed-output path (no wrapper transpose pass): (P, N2) slab.
    out_t = jax.block_until_ready(
        simple_value_tail(x2, w, b, tile_n=128, min_rows_for_pallas=0,
                          transposed_output=True))
    assert out_t.shape == (P, N2)
    assert jnp.allclose(out_t.T, ref2, atol=2e-3, rtol=2e-3)

    print("KERNEL_OK")
</pallas_src>

<mosaic_0001>
module attributes {stable_mosaic.version = 11 : i64} {
  func.func @_value_tail_kernel(%arg0: i32, %arg1: memref<8x32xf32, #tpu.memory_space<vmem>>, %arg2: memref<4x32xf32, #tpu.memory_space<vmem>>, %arg3: memref<4x1xf32, #tpu.memory_space<vmem>>, %arg4: memref<4x8xf32, #tpu.memory_space<vmem>>) attributes {dimension_semantics = [#tpu.dimension_semantics<parallel>], iteration_bounds = array<i64: 1>, scalar_prefetch = 0 : i64, scratch_operands = 0 : i64, tpu.core_type = #tpu.core_type<tc>, window_params = [{transform_indices = @transform_0, window_bounds = array<i64: 8, 32>}, {pipeline_mode = #tpu.pipeline_mode<synchronous>, transform_indices = @transform_1, window_bounds = array<i64: 4, 32>}, {pipeline_mode = #tpu.pipeline_mode<synchronous>, transform_indices = @transform_2, window_bounds = array<i64: 4, 1>}, {transform_indices = @transform_3, window_bounds = array<i64: 4, 8>}]} {
    %c0 = arith.constant 0 : index
    %c0_0 = arith.constant 0 : index
    %0 = vector.load %arg1[%c0, %c0_0] : memref<8x32xf32, #tpu.memory_space<vmem>>, vector<8x32xf32>
    %c0_1 = arith.constant 0 : index
    %c0_2 = arith.constant 0 : index
    %1 = vector.load %arg2[%c0_1, %c0_2] : memref<4x32xf32, #tpu.memory_space<vmem>>, vector<4x32xf32>
    %cst = arith.constant dense<0.000000e+00> : vector<4x8xf32>
    %2 = tpu.matmul %1, %0, %cst {dimension_numbers = #tpu.dot_dimension_numbers<[1], [1], [0], [0], [0, 0, 1, 0], [], []>} : vector<4x32xf32>, vector<8x32xf32>, vector<4x8xf32> -> vector<4x8xf32>
    %c0_3 = arith.constant 0 : index
    %c0_4 = arith.constant 0 : index
    %3 = vector.load %arg3[%c0_3, %c0_4] : memref<4x1xf32, #tpu.memory_space<vmem>>, vector<4x1xf32>
    %4 = vector.broadcast %3 : vector<4x1xf32> to vector<4x8xf32>
    %5 = arith.addf %2, %4 : vector<4x8xf32>
    %cst_5 = arith.constant dense<0xFF800000> : vector<8xf32>
    %6 = vector.multi_reduction <maximumf>, %5, %cst_5 [0] : vector<4x8xf32> to vector<8xf32>
    %7 = vector.shape_cast %6 : vector<8xf32> to vector<1x8xf32>
    %8 = vector.broadcast %7 : vector<1x8xf32> to vector<4x8xf32>
    %9 = arith.subf %5, %8 : vector<4x8xf32>
    %10 = math.exp %9 : vector<4x8xf32>
    %cst_6 = arith.constant dense<0.000000e+00> : vector<8xf32>
    %11 = vector.multi_reduction <add>, %10, %cst_6 [0] : vector<4x8xf32> to vector<8xf32>
    %12 = vector.shape_cast %11 : vector<8xf32> to vector<1x8xf32>
    %13 = tpu.reciprocal %12 {approx = true} : vector<1x8xf32> -> vector<1x8xf32>
    %14 = vector.broadcast %13 : vector<1x8xf32> to vector<4x8xf32>
    %15 = arith.mulf %10, %14 : vector<4x8xf32>
    %c0_7 = arith.constant 0 : index
    %c0_8 = arith.constant 0 : index
    %16 = vector.load %arg4[%c0_7, %c0_8] : memref<4x8xf32, #tpu.memory_space<vmem>>, vector<4x8xf32>
    tpu.vector_store %arg4[%c0_7, %c0_8], %15 {strides = array<i32>} : memref<4x8xf32, #tpu.memory_space<vmem>>, vector<4x8xf32>,
    return
  }
  func.func @transform_0(%arg0: i32) -> (i32, i32) {
    %c0_i32 = arith.constant 0 : i32
    %c0_i32_0 = arith.constant 0 : i32
    return %arg0, %c0_i32 : i32, i32
  }
  func.func @transform_1(%arg0: i32) -> (i32, i32) {
    %c0_i32 = arith.constant 0 : i32
    %c0_i32_0 = arith.constant 0 : i32
    %c0_i32_1 = arith.constant 0 : i32
    return %c0_i32, %c0_i32_0 : i32, i32
  }
  func.func @transform_2(%arg0: i32) -> (i32, i32) {
    %c0_i32 = arith.constant 0 : i32
    %c0_i32_0 = arith.constant 0 : i32
    %c0_i32_1 = arith.constant 0 : i32
    return %c0_i32, %c0_i32_0 : i32, i32
  }
  func.func @transform_3(%arg0: i32) -> (i32, i32) {
    %c0_i32 = arith.constant 0 : i32
    %c0_i32_0 = arith.constant 0 : i32
    return %c0_i32, %arg0 : i32, i32
  }
}

</mosaic_0001>

<llo_original>
// kernel: tpu_custom_call.1
$region0: #{tpu_custom_call.1}
  #allocation0 [shape = 'u32[]', space=smem, size = 0x4, offset = 0x4, fixed_abs, tag = 'smem constant byte address 0x4 - core index']
  #allocation1 [shape = 'u32[144,128]{1,0:T(1,128)}', space=vmem, size = 0x12000, scoped, tag = 'internal scratch']
  %s0 = inlined_call_operand.hbm [shape: f32[8,32], index: 0, kind: input, shape index: {}]
  %s1 = inlined_call_operand.vmem [shape: f32[4,32], index: 1, kind: input, shape index: {}]
  %s2 = inlined_call_operand.vmem [shape: f32[4,1], index: 2, kind: input, shape index: {}]
  %s3 = inlined_call_operand.hbm [shape: f32[4,8], index: 3, kind: output, shape index: {}]
  %s4 = sld [smem:[#allocation0]]
  $region26: #{tpu_custom_call.1} parent=0
    _
  %s6 = ssub.s32 1, %s4
  %s7 = scalar_select 0, %s6, %s4
  $region1: #{tpu_custom_call.1} parent=0
    #allocation2 [shape = 'u8[4096]{0}', space=vmem, size = 0x1000, scoped, tag = 'input window, operand 0, single buffered']
    #allocation3 [shape = 's32[1]{0}', space=sflag, size = 0x4, scoped, tag = 'scoped memory for tpu_custom_call.1']
    #allocation4 [shape = 's32[1]{0}', space=sflag, size = 0x4, scoped, tag = 'scoped memory for tpu_custom_call.1']
    #allocation5 [shape = 'u8[2048]{0}', space=vmem, size = 0x800, scoped, tag = 'output window, operand 0, single buffered']
    %8 = vsyncpa [#allocation3], 0
    %9 = vsyncpa [#allocation4], 0
    // Predicated region
    $region2: #{tpu_custom_call.1} parent=1 // pred_check
      _
    $region3: #{tpu_custom_call.1} parent=1 // pred_check_branch
      %11 = sbr.rel (0) target = $region5
    $region4: #{tpu_custom_call.1} parent=1 // pred_region
      %s13 = ssub.s32 128, 128
      %14 = vsyncadd [#allocation3], %s13
      %s16 = sshll.u32 [#allocation2], 4
      %s17 = int_to_ptr.vmem [resolvable:$true] %s16
      %19 = dma.hbm_to_vmem [thread:$0]  %s0, 128, %s17, [#allocation3]
    $region5: #{tpu_custom_call.1} parent=1 // pred_fallthru
      _
    // Predicated region
    $region6: #{tpu_custom_call.1} parent=1 // pred_check
      _
    $region7: #{tpu_custom_call.1} parent=1 // pred_check_branch
      %21 = sbr.rel (0) target = $region9
    $region8: #{tpu_custom_call.1} parent=1 // pred_region
      _
    $region9: #{tpu_custom_call.1} parent=1 // pred_fallthru
      _
    // Predicated region
    $region10: #{tpu_custom_call.1} parent=1 // pred_check
      _
    $region11: #{tpu_custom_call.1} parent=1 // pred_check_branch
      %23 = sbr.rel (0) target = $region13
    $region12: #{tpu_custom_call.1} parent=1 // pred_region
      _
    $region13: #{tpu_custom_call.1} parent=1 // pred_fallthru
      _
    // Predicated region
    $region14: #{tpu_custom_call.1} parent=1 // pred_check
      _
    $region15: #{tpu_custom_call.1} parent=1 // pred_check_branch
      %25 = sbr.rel (0) target = $region17
    $region16: #{tpu_custom_call.1} parent=1 // pred_region
      %26 = dma.done [#allocation3], 128
    $region17: #{tpu_custom_call.1} parent=1 // pred_fallthru
      _
    %v27 = vld [vmem:[#allocation2] sm:$0xff]
    %v28 = vld [vmem:[%s1] sm:$0xf]
    %v29 = vld [vmem:[%s2] sm:$0xf]
    %31 = vset.pattern.permute.xlu0 0
    %32 = vperm.xlu0 %31, %v29
    %v33 = vpop.permute.xlu0 %32
    %vm35 = vcmask 261120
    %v37 = vsel %vm35, %v28, 0
    %v40 = vsel %vm35, %v27, 0
    %42 = vmatprep.subr.mxu0 0.0
    %43 = vmatpush1.xpose.msra.mxu0 %v40
    %44 = vmatprep.subr.mxu0 0.0
    %45 = vmatpush1.xpose.msra.mxu0 0.0
    %46 = vmatprep.subr.mxu0 0.0
    %47 = vmatpush1.xpose.msra.mxu0 0.0
    %48 = vmatprep.subr.mxu0 0.0
    %49 = vmatpush1.xpose.msra.mxu0 0.0
    %50 = vmatprep.subr.mxu0 0.0
    %51 = vmatpush1.xpose.msra.mxu0 0.0
    %52 = vmatprep.subr.mxu0 0.0
    %53 = vmatpush1.xpose.msra.mxu0 0.0
    %54 = vmatprep.subr.mxu0 0.0
    %55 = vmatpush1.xpose.msra.mxu0 0.0
    %56 = vmatprep.subr.mxu0 0.0
    %57 = vmatpush1.xpose.msra.mxu0 0.0
    %58 = vmatprep.subr.mxu0 0.0
    %59 = vmatpush1.xpose.msra.mxu0 0.0
    %60 = vmatprep.subr.mxu0 0.0
    %61 = vmatpush1.xpose.msra.mxu0 0.0
    %62 = vmatprep.subr.mxu0 0.0
    %63 = vmatpush1.xpose.msra.mxu0 0.0
    %64 = vmatprep.subr.mxu0 0.0
    %65 = vmatpush1.xpose.msra.mxu0 0.0
    %66 = vmatprep.subr.mxu0 0.0
    %67 = vmatpush1.xpose.msra.mxu0 0.0
    %68 = vmatprep.subr.mxu0 0.0
    %69 = vmatpush1.xpose.msra.mxu0 0.0
    %70 = vmatprep.subr.mxu0 0.0
    %71 = vmatpush1.xpose.msra.mxu0 0.0
    %72 = vmatprep.subr.mxu0 0.0
    %73 = vmatpush1.xpose.msra.mxu0 0.0
    %74 = vmatprep.subr.mxu0 0.0
    %75 = vmatpush1.xpose.msra.mxu0 0.0
    %76 = vmatprep.subr.mxu0 0.0
    %77 = vmatpush1.xpose.msra.mxu0 0.0
    %78 = vmatprep.subr.mxu0 0.0
    %79 = vmatpush1.xpose.msra.mxu0 0.0
    %80 = vmatprep.subr.mxu0 0.0
    %81 = vmatpush1.xpose.msra.mxu0 0.0
    %82 = vmatprep.subr.mxu0 0.0
    %83 = vmatpush1.xpose.msra.mxu0 0.0
    %84 = vmatprep.subr.mxu0 0.0
    %85 = vmatpush1.xpose.msra.mxu0 0.0
    %86 = vmatprep.subr.mxu0 0.0
    %87 = vmatpush1.xpose.msra.mxu0 0.0
    %88 = vmatprep.subr.mxu0 0.0
    %89 = vmatpush1.xpose.msra.mxu0 0.0
    %90 = vmatprep.subr.mxu0 0.0
    %91 = vmatpush1.xpose.msra.mxu0 0.0
    %92 = vmatprep.subr.mxu0 0.0
    %93 = vmatpush1.xpose.msra.mxu0 0.0
    %94 = vmatprep.subr.mxu0 0.0
    %95 = vmatpush1.xpose.msra.mxu0 0.0
    %96 = vmatprep.subr.mxu0 0.0
    %97 = vmatpush1.xpose.msra.mxu0 0.0
    %98 = vmatprep.subr.mxu0 0.0
    %99 = vmatpush1.xpose.msra.mxu0 0.0
    %100 = vmatprep.subr.mxu0 0.0
    %101 = vmatpush1.xpose.msra.mxu0 0.0
    %102 = vmatprep.subr.mxu0 0.0
    %103 = vmatpush1.xpose.msra.mxu0 0.0
    %104 = vmatprep.subr.mxu0 0.0
    %105 = vmatpush1.xpose.msra.mxu0 0.0
    %106 = vmatprep.mubr.f32.mxu0 0.0
    %107 = vmatmul.mubr.f32.gmra.mrb[0].mxu0 %v37
    %v108 = vpop.f32.mrb[0].mxu0
    %v109 = vadd.f32 %v33, %v108
    %v110 = vpop.f32.mrb[0].mxu0
    %111 = vdwg.mxu0
    %vm112 = vcmask 60416
    %v113 = vsel %vm112, %v109, -inf
    %v114 = vrot.slane %v113, 4
    %v115 = vmax.f32 %v113, %v114
    %v116 = vrot.slane %v115, 2
    %v117 = vmax.f32 %v115, %v116
    %v118 = vrot.slane %v117, 1
    %v119 = vmax.f32 %v117, %v118
    %v120 = vsub.f32 %v109, %v119
    %v121 = vmul.f32 %v120, 1.442695
    %v122 = vpow.pop %v121
    %v123 = vsel %vm112, %v122, 0.0
    %v124 = vrot.slane %v123, 4
    %v125 = vadd.f32 %v123, %v124
    %v126 = vrot.slane %v125, 2
    %v127 = vadd.f32 %v125, %v126
    %v128 = vrot.slane %v127, 1
    %v129 = vadd.f32 %v127, %v128
    %v130 = vrcp.pop %v129
    %v131 = vmul.f32 %v122, %v130
    %132 = vst.msk [vmem:[#allocation5] sm:$0xf] %vm112, %v131
    // Predicated region
    $region18: #{tpu_custom_call.1} parent=1 // pred_check
      _
    $region19: #{tpu_custom_call.1} parent=1 // pred_check_branch
      %134 = sbr.rel (0) target = $region21
    $region20: #{tpu_custom_call.1} parent=1 // pred_region
      %s136 = ssub.s32 64, 64
      %137 = vsyncadd [#allocation4], %s136
      %s139 = sshll.u32 [#allocation5], 4
      %s140 = int_to_ptr.vmem [resolvable:$true] %s139
      %142 = dma.vmem_to_hbm [thread:$0]  %s140, 64, %s3, [#allocation4]
    $region21: #{tpu_custom_call.1} parent=1 // pred_fallthru
      _
    // Predicated region
    $region22: #{tpu_custom_call.1} parent=1 // pred_check
      _
    $region23: #{tpu_custom_call.1} parent=1 // pred_check_branch
      %144 = sbr.rel (0) target = $region25
    $region24: #{tpu_custom_call.1} parent=1 // pred_region
      %145 = dma.done [#allocation4], 64
    $region25: #{tpu_custom_call.1} parent=1 // pred_fallthru
      _
    %146 = vsyncpa [#allocation3], 1
    %147 = vsyncpa [#allocation4], 1

</llo_original>
